<compile_context>
chip_gen: v7x
topology: tpu7x:2x2x1
jax: 0.10.0
libtpu: 0.0.40
codegen_flags: <defaults>
</compile_context>

<pallas_src>
import functools

import numpy as np
import jax
import jax.numpy as jnp
from jax.experimental import pallas as pl
from jax.experimental.pallas import tpu as pltpu


def _dino_loss_kernel(scalar_ref, student_ref, teacher_ref, center_ref,
                      loss_ref, tsum_ref,
                      q_sum_ref, s_sum_ref, diag_ref, norm_ref, *,
                      n_teacher_views: int, n_student_views: int,
                      n_grid_views: int, row_tile: int, valid_rows):
    """Grid step (i, j): batch-row tile i, view j.

    scalar_ref  (SMEM f32[2]):      [teacher_temp, student_temp]
    student_ref (VMEM [1, tb, P]):  student view min(j, Vs-1), native dtype
    teacher_ref (VMEM [1, tb, P]):  teacher view min(j, Vt-1), native dtype
    center_ref  (VMEM f32[1, P])
    loss_ref    (VMEM f32[1, 8, 128]): per-tile loss partial (scalar, bcast)
    tsum_ref    (VMEM f32[1, 8, P]):   per-tile teacher column sum (rows equal)
    scratch: q_sum/s_sum f32[tb, P], diag/norm f32[tb, 1]
    """
    j = pl.program_id(1)

    @pl.when(j == 0)
    def _init():
        q_sum_ref[...] = jnp.zeros_like(q_sum_ref)
        s_sum_ref[...] = jnp.zeros_like(s_sum_ref)
        diag_ref[...] = jnp.zeros_like(diag_ref)
        norm_ref[...] = jnp.zeros_like(norm_ref)
        tsum_ref[...] = jnp.zeros_like(tsum_ref)
        loss_ref[...] = jnp.zeros_like(loss_ref)

    inv_teacher_temp = 1.0 / scalar_ref[0]
    inv_student_temp = 1.0 / scalar_ref[1]

    # ---- student view j: scaled logits + log-softmax normalizer ----------
    # The full-width log-softmax subtraction is factored out of the pair loop
    # (sum_p q == 1); only the per-row normalizer (max + lse) is kept.
    s = student_ref[0].astype(jnp.float32) * inv_student_temp      # (tb, P)
    s_max = jnp.max(s, axis=-1, keepdims=True)                      # (tb, 1)
    lse = jnp.log(jnp.sum(jnp.exp(s - s_max), axis=-1, keepdims=True))
    norm_j = s_max + lse                                            # (tb, 1)

    def _acc_student():
        s_sum_ref[...] += s
        norm_ref[...] += norm_j

    if n_student_views == n_grid_views:
        _acc_student()
    else:
        pl.when(j < n_student_views)(_acc_student)

    # ---- teacher view j (only while j < Vt) -------------------------------
    n_diag = min(n_teacher_views, n_student_views)

    @pl.when(j < n_teacher_views)
    def _teacher():
        t_raw = teacher_ref[0].astype(jnp.float32)                  # (tb, P)
        tl = (t_raw - center_ref[...]) * inv_teacher_temp
        te = jnp.exp(tl - jnp.max(tl, axis=-1, keepdims=True))
        inv_den = pl.reciprocal(jnp.sum(te, axis=-1, keepdims=True),
                                approx=True)
        q = te * inv_den                                            # (tb, P)
        q_sum_ref[...] += q

        # Batch-row reduction on the otherwise idle MXU; all 8 output rows
        # carry the same column sum.
        tsum_ref[...] += jnp.dot(
            jnp.ones((8, t_raw.shape[0]), jnp.float32), t_raw,
            preferred_element_type=jnp.float32)[None]

        # Diagonal (iq == iv == j) term, normalizer factored out.
        def _acc_diag():
            diag_ref[...] += jnp.sum(q * s, axis=-1, keepdims=True) - norm_j

        if n_diag == n_teacher_views:
            _acc_diag()
        else:
            pl.when(j < n_diag)(_acc_diag)

    # ---- finalize at the last view step -----------------------------------
    @pl.when(j == n_grid_views - 1)
    def _finalize():
        # Cross-entropy sum over all (iq, iv) pairs minus diagonal pairs:
        #   sum_p(q_sum * s_sum) - Vt * sum_iv(norm_iv) - diag
        cross_all = (jnp.sum(q_sum_ref[...] * s_sum_ref[...], axis=-1,
                             keepdims=True)
                     - jnp.float32(n_teacher_views) * norm_ref[...])
        cross = cross_all - diag_ref[...]                           # (tb, 1)
        if valid_rows is not None:
            row0 = pl.program_id(0) * row_tile
            rows = row0 + jax.lax.broadcasted_iota(jnp.int32, cross.shape, 0)
            cross = jnp.where(rows < valid_rows, cross, 0.0)
        part = -jnp.sum(cross)
        loss_ref[...] = jnp.full(loss_ref.shape, part, jnp.float32)


def _vmem_plan():
    """Generation-aware (VMEM limit, block-pick budget) in bytes."""
    cap = 64 << 20                      # conservative fallback (v7x-sized)
    try:
        info = pltpu.get_tpu_info()
        cap = int(getattr(info, "vmem_capacity_bytes", cap))
    except Exception:
        pass
    vmem_limit = int(min(cap * 3 // 4, 112 << 20))   # ~48 MiB v7x, ~96 MiB v5e/v6e
    block_budget = int(vmem_limit * 2 // 3)          # headroom for temps/spills
    return vmem_limit, block_budget


def _pick_row_tile(batch, p, itemsize, block_budget):
    """Largest multiple-of-8 row tile under the budget (any batch size)."""
    # Per row per grid step: student + teacher input blocks (double-buffered,
    # native dtype) + q_sum/s_sum f32 scratch + ~3 live (tb, P) f32 temps.
    per_row = 4 * p * itemsize + 5 * p * 4
    fixed = 3 * 8 * p * 4 + (256 << 10)              # tsum out (2 bufs) + slack
    cap = max(8, (block_budget - fixed) // max(per_row, 1))
    cap = int(min(cap, 512))
    cap = max(8, (cap // 8) * 8)
    padded_batch = ((batch + 7) // 8) * 8
    if padded_batch <= cap:
        return padded_batch
    # Prefer a tile that divides the 8-padded batch (no extra padding).
    for tb in range(cap, 7, -8):
        if padded_batch % tb == 0:
            return tb
    return cap


def dino_loss_pallas(student_output, teacher_output, center,
                     teacher_temp, student_temp, center_momentum,
                     num_large_crops):
    """Returns (loss scalar, new_center (1, P)) — the DINOLoss forward."""
    ns, p = student_output.shape
    nt, p2 = teacher_output.shape
    assert p == p2, "student/teacher prototype dims must match"
    assert nt % num_large_crops == 0, "teacher rows must split into large crops"
    batch = nt // num_large_crops
    assert ns % batch == 0, "student rows must split into equal view chunks"

    n_teacher_views = num_large_crops
    n_student_views = ns // batch
    n_grid_views = max(n_student_views, n_teacher_views)
    n_diag = min(n_student_views, n_teacher_views)
    n_terms = n_teacher_views * n_student_views - n_diag   # pairs with iv != iq

    # Native-dtype ingest; view-major layout (free metadata reshape) so the
    # kernel selects views purely via the grid axis / leading-axis indexing.
    student = student_output.reshape(n_student_views, batch, p)
    teacher = teacher_output.reshape(n_teacher_views, batch, p)
    center_f32 = center.astype(jnp.float32).reshape(1, p)

    itemsize = max(jnp.dtype(student.dtype).itemsize,
                   jnp.dtype(teacher.dtype).itemsize)
    vmem_limit, block_budget = _vmem_plan()
    tb = _pick_row_tile(batch, p, itemsize, block_budget)
    num_tiles = -(-batch // tb)
    padded = num_tiles * tb
    if padded != batch:
        pad = padded - batch
        student = jnp.pad(student, ((0, 0), (0, pad), (0, 0)))
        teacher = jnp.pad(teacher, ((0, 0), (0, pad), (0, 0)))
        valid_rows = batch          # mask padded rows inside the kernel
    else:
        valid_rows = None

    scalars = jnp.array([teacher_temp, student_temp], dtype=jnp.float32)

    kernel = functools.partial(
        _dino_loss_kernel,
        n_teacher_views=n_teacher_views,
        n_student_views=n_student_views,
        n_grid_views=n_grid_views,
        row_tile=tb,
        valid_rows=valid_rows,
    )

    # View index maps: clamp to the last valid view once a side runs out of
    # views; the repeated block index means Pallas skips the redundant DMA.
    if n_student_views == n_grid_views:
        s_view = lambda i, j: (j, i, 0)
    else:
        s_view = lambda i, j: (jnp.minimum(j, n_student_views - 1), i, 0)
    if n_teacher_views == n_grid_views:
        t_view = lambda i, j: (j, i, 0)
    else:
        t_view = lambda i, j: (jnp.minimum(j, n_teacher_views - 1), i, 0)

    loss_parts, tsum_parts = pl.pallas_call(
        kernel,
        out_shape=(jax.ShapeDtypeStruct((num_tiles, 8, 128), jnp.float32),
                   jax.ShapeDtypeStruct((num_tiles, 8, p), jnp.float32)),
        grid=(num_tiles, n_grid_views),
        in_specs=[
            pl.BlockSpec(memory_space=pltpu.MemorySpace.SMEM),     # temps
            pl.BlockSpec((1, tb, p), s_view),                      # student
            pl.BlockSpec((1, tb, p), t_view),                      # teacher
            pl.BlockSpec((1, p), lambda i, j: (0, 0)),             # center
        ],
        out_specs=(
            pl.BlockSpec((1, 8, 128), lambda i, j: (i, 0, 0)),     # loss part
            pl.BlockSpec((1, 8, p), lambda i, j: (i, 0, 0)),       # teacher sum
        ),
        scratch_shapes=[
            pltpu.VMEM((tb, p), jnp.float32),     # q_sum
            pltpu.VMEM((tb, p), jnp.float32),     # s_sum
            pltpu.VMEM((tb, 1), jnp.float32),     # diag
            pltpu.VMEM((tb, 1), jnp.float32),     # norm
        ],
        compiler_params=pltpu.CompilerParams(
            dimension_semantics=("parallel", "arbitrary"),
            vmem_limit_bytes=vmem_limit,
        ),
    )(scalars, student, teacher, center_f32)

    # Tiny final reductions (O(num_tiles * P)) + EMA center update in XLA.
    loss = jnp.sum(loss_parts[:, 0, 0]) / jnp.float32(batch * n_terms)
    batch_center = (jnp.sum(tsum_parts[:, 0, :], axis=0, keepdims=True)
                    / jnp.float32(nt))
    # TODO(synk): torch.distributed all_reduce of batch_center (multi-host
    # center sync) has no single-device equivalent here.
    new_center = (center_f32 * center_momentum
                  + batch_center * (1.0 - center_momentum))
    return loss, new_center


def build_teacher_temp_schedule(warmup_teacher_temp, teacher_temp, num_steps,
                                warmup_steps):
    """Mirror of DINOLoss.setup_temp_schedule (absolute warmup step count)."""
    return np.concatenate((
        np.linspace(warmup_teacher_temp, teacher_temp, warmup_steps),
        np.ones(num_steps - warmup_steps) * teacher_temp,
    ))


def dino_loss_reference(student_output, teacher_output, center,
                        teacher_temp, student_temp, center_momentum,
                        num_large_crops):
    """Pure-JAX reference of the PyTorch forward for validation."""
    t = jax.nn.softmax((teacher_output - center) / teacher_temp, axis=-1)
    nt = teacher_output.shape[0]
    batch = nt // num_large_crops
    s = student_output / student_temp
    n_student_chunks = student_output.shape[0] // batch
    total, n_terms = 0.0, 0
    for iq in range(num_large_crops):
        q = t[iq * batch:(iq + 1) * batch]
        for iv in range(n_student_chunks):
            if iv == iq:
                continue
            v = jax.nn.log_softmax(s[iv * batch:(iv + 1) * batch], axis=-1)
            total = total + jnp.mean(jnp.sum(-q * v, axis=-1))
            n_terms += 1
    loss = total / n_terms
    batch_center = jnp.sum(teacher_output, axis=0, keepdims=True) / nt
    new_center = center * center_momentum + batch_center * (1 - center_momentum)
    return loss, new_center


if __name__ == "__main__":
    # --- module hyperparameters (as in DINOLoss.__init__) ---
    num_prototypes = 128
    warmup_teacher_temp = 0.04
    teacher_temp = 0.07
    student_temp = 0.1
    num_large_crops = 2
    center_momentum = 0.9

    # temperature schedule (plain numpy glue, as in setup_temp_schedule)
    num_steps = 100
    schedule = build_teacher_temp_schedule(
        warmup_teacher_temp, teacher_temp, num_steps, warmup_steps=30)
    step = 0
    temp = float(schedule[step])

    # --- deterministic synthetic inputs ---
    # student has 3 views (2 large + 1 small crop), teacher has 2 large views.
    batch = 8
    num_student_views = 3
    key = jax.random.PRNGKey(0)
    k1, k2 = jax.random.split(key)
    student_output = jax.random.normal(
        k1, (num_student_views * batch, num_prototypes), dtype=jnp.float32)
    teacher_output = jax.random.normal(
        k2, (num_large_crops * batch, num_prototypes), dtype=jnp.float32)
    center = jnp.zeros((1, num_prototypes), dtype=jnp.float32)  # buffer

    # --- run Pallas kernel ---
    loss, new_center = dino_loss_pallas(
        student_output, teacher_output, center,
        temp, student_temp, center_momentum, num_large_crops)
    loss = jax.block_until_ready(loss)
    new_center = jax.block_until_ready(new_center)

    # --- validate against pure-JAX reference ---
    ref_loss, ref_center = dino_loss_reference(
        student_output, teacher_output, center,
        temp, student_temp, center_momentum, num_large_crops)
    np.testing.assert_allclose(np.asarray(loss), np.asarray(ref_loss),
                               rtol=1e-3, atol=1e-3)
    np.testing.assert_allclose(np.asarray(new_center), np.asarray(ref_center),
                               rtol=1e-3, atol=1e-3)

    print("KERNEL_OK")
</pallas_src>

<mosaic_0001>
module attributes {stable_mosaic.version = 11 : i64} {
  func.func @_dino_loss_kernel(%arg0: i32, %arg1: i32, %arg2: memref<2xf32, #tpu.memory_space<smem>>, %arg3: memref<1x8x128xf32, #tpu.memory_space<vmem>>, %arg4: memref<1x8x128xf32, #tpu.memory_space<vmem>>, %arg5: memref<1x128xf32, #tpu.memory_space<vmem>>, %arg6: memref<1x8x128xf32, #tpu.memory_space<vmem>>, %arg7: memref<1x8x128xf32, #tpu.memory_space<vmem>>, %arg8: memref<8x128xf32, #tpu.memory_space<vmem>>, %arg9: memref<8x128xf32, #tpu.memory_space<vmem>>, %arg10: memref<8x1xf32, #tpu.memory_space<vmem>>, %arg11: memref<8x1xf32, #tpu.memory_space<vmem>>) attributes {dimension_semantics = [#tpu.dimension_semantics<parallel>, #tpu.dimension_semantics<arbitrary>], iteration_bounds = array<i64: 1, 3>, scalar_prefetch = 0 : i64, scratch_operands = 4 : i64, tpu.core_type = #tpu.core_type<tc>, window_params = [{transform_indices = @transform_0, window_bounds = array<i64: 2>}, {transform_indices = @transform_1, window_bounds = array<i64: 1, 8, 128>}, {transform_indices = @transform_2, window_bounds = array<i64: 1, 8, 128>}, {pipeline_mode = #tpu.pipeline_mode<synchronous>, transform_indices = @transform_3, window_bounds = array<i64: 1, 128>}, {transform_indices = @transform_4, window_bounds = array<i64: 1, 8, 128>}, {transform_indices = @transform_5, window_bounds = array<i64: 1, 8, 128>}]} {
    %c0_i32 = arith.constant 0 : i32
    %0 = arith.cmpi eq, %arg1, %c0_i32 : i32
    %1 = arith.extui %0 : i1 to i32
    %c0_i32_0 = arith.constant 0 : i32
    %2 = arith.cmpi ne, %1, %c0_i32_0 : i32
    scf.if %2 {
      %cst_18 = arith.constant 0.000000e+00 : f32
      %32 = vector.broadcast %cst_18 : f32 to vector<8x128xf32>
      %c0_19 = arith.constant 0 : index
      %c0_20 = arith.constant 0 : index
      %33 = vector.load %arg8[%c0_19, %c0_20] : memref<8x128xf32, #tpu.memory_space<vmem>>, vector<8x128xf32>
      tpu.vector_store %arg8[%c0_19, %c0_20], %32 {strides = array<i32>} : memref<8x128xf32, #tpu.memory_space<vmem>>, vector<8x128xf32>,
      %cst_21 = arith.constant 0.000000e+00 : f32
      %34 = vector.broadcast %cst_21 : f32 to vector<8x128xf32>
      %c0_22 = arith.constant 0 : index
      %c0_23 = arith.constant 0 : index
      %35 = vector.load %arg9[%c0_22, %c0_23] : memref<8x128xf32, #tpu.memory_space<vmem>>, vector<8x128xf32>
      tpu.vector_store %arg9[%c0_22, %c0_23], %34 {strides = array<i32>} : memref<8x128xf32, #tpu.memory_space<vmem>>, vector<8x128xf32>,
      %cst_24 = arith.constant 0.000000e+00 : f32
      %36 = vector.broadcast %cst_24 : f32 to vector<8x1xf32>
      %c0_25 = arith.constant 0 : index
      %c0_26 = arith.constant 0 : index
      %37 = vector.load %arg10[%c0_25, %c0_26] : memref<8x1xf32, #tpu.memory_space<vmem>>, vector<8x1xf32>
      tpu.vector_store %arg10[%c0_25, %c0_26], %36 {strides = array<i32>} : memref<8x1xf32, #tpu.memory_space<vmem>>, vector<8x1xf32>,
      %cst_27 = arith.constant 0.000000e+00 : f32
      %38 = vector.broadcast %cst_27 : f32 to vector<8x1xf32>
      %c0_28 = arith.constant 0 : index
      %c0_29 = arith.constant 0 : index
      %39 = vector.load %arg11[%c0_28, %c0_29] : memref<8x1xf32, #tpu.memory_space<vmem>>, vector<8x1xf32>
      tpu.vector_store %arg11[%c0_28, %c0_29], %38 {strides = array<i32>} : memref<8x1xf32, #tpu.memory_space<vmem>>, vector<8x1xf32>,
      %cst_30 = arith.constant 0.000000e+00 : f32
      %40 = vector.broadcast %cst_30 : f32 to vector<1x8x128xf32>
      %c0_31 = arith.constant 0 : index
      %c0_32 = arith.constant 0 : index
      %c0_33 = arith.constant 0 : index
      %41 = vector.load %arg7[%c0_31, %c0_32, %c0_33] : memref<1x8x128xf32, #tpu.memory_space<vmem>>, vector<1x8x128xf32>
      tpu.vector_store %arg7[%c0_31, %c0_32, %c0_33], %40 {strides = array<i32>} : memref<1x8x128xf32, #tpu.memory_space<vmem>>, vector<1x8x128xf32>,
      %cst_34 = arith.constant 0.000000e+00 : f32
      %42 = vector.broadcast %cst_34 : f32 to vector<1x8x128xf32>
      %c0_35 = arith.constant 0 : index
      %c0_36 = arith.constant 0 : index
      %c0_37 = arith.constant 0 : index
      %43 = vector.load %arg6[%c0_35, %c0_36, %c0_37] : memref<1x8x128xf32, #tpu.memory_space<vmem>>, vector<1x8x128xf32>
      tpu.vector_store %arg6[%c0_35, %c0_36, %c0_37], %42 {strides = array<i32>} : memref<1x8x128xf32, #tpu.memory_space<vmem>>, vector<1x8x128xf32>,
    } else {
    }
    %c0 = arith.constant 0 : index
    %3 = memref.load %arg2[%c0] : memref<2xf32, #tpu.memory_space<smem>>
    %cst = arith.constant 1.000000e+00 : f32
    %4 = arith.divf %cst, %3 : f32
    %c1 = arith.constant 1 : index
    %5 = memref.load %arg2[%c1] : memref<2xf32, #tpu.memory_space<smem>>
    %cst_1 = arith.constant 1.000000e+00 : f32
    %6 = arith.divf %cst_1, %5 : f32
    %c0_2 = arith.constant 0 : index
    %c0_3 = arith.constant 0 : index
    %c0_4 = arith.constant 0 : index
    %7 = vector.load %arg3[%c0_2, %c0_3, %c0_4] : memref<1x8x128xf32, #tpu.memory_space<vmem>>, vector<1x8x128xf32>
    %8 = vector.shape_cast %7 : vector<1x8x128xf32> to vector<8x128xf32>
    %9 = vector.broadcast %6 : f32 to vector<8x128xf32>
    %10 = arith.mulf %8, %9 : vector<8x128xf32>
    %cst_5 = arith.constant dense<0xFF800000> : vector<8xf32>
    %11 = vector.multi_reduction <maximumf>, %10, %cst_5 [1] : vector<8x128xf32> to vector<8xf32>
    %12 = vector.shape_cast %11 : vector<8xf32> to vector<8x1xf32>
    %13 = vector.broadcast %12 : vector<8x1xf32> to vector<8x128xf32>
    %14 = arith.subf %10, %13 : vector<8x128xf32>
    %15 = math.exp %14 : vector<8x128xf32>
    %cst_6 = arith.constant dense<0.000000e+00> : vector<8xf32>
    %16 = vector.multi_reduction <add>, %15, %cst_6 [1] : vector<8x128xf32> to vector<8xf32>
    %17 = vector.shape_cast %16 : vector<8xf32> to vector<8x1xf32>
    %18 = math.log %17 : vector<8x1xf32>
    %19 = arith.addf %12, %18 : vector<8x1xf32>
    %c0_7 = arith.constant 0 : index
    %c0_8 = arith.constant 0 : index
    %20 = vector.load %arg9[%c0_7, %c0_8] : memref<8x128xf32, #tpu.memory_space<vmem>>, vector<8x128xf32>
    %21 = arith.addf %20, %10 : vector<8x128xf32>
    %c0_9 = arith.constant 0 : index
    %c0_10 = arith.constant 0 : index
    %22 = vector.load %arg9[%c0_9, %c0_10] : memref<8x128xf32, #tpu.memory_space<vmem>>, vector<8x128xf32>
    tpu.vector_store %arg9[%c0_9, %c0_10], %21 {strides = array<i32>} : memref<8x128xf32, #tpu.memory_space<vmem>>, vector<8x128xf32>,
    %c0_11 = arith.constant 0 : index
    %c0_12 = arith.constant 0 : index
    %23 = vector.load %arg11[%c0_11, %c0_12] : memref<8x1xf32, #tpu.memory_space<vmem>>, vector<8x1xf32>
    %24 = arith.addf %23, %19 : vector<8x1xf32>
    %c0_13 = arith.constant 0 : index
    %c0_14 = arith.constant 0 : index
    %25 = vector.load %arg11[%c0_13, %c0_14] : memref<8x1xf32, #tpu.memory_space<vmem>>, vector<8x1xf32>
    tpu.vector_store %arg11[%c0_13, %c0_14], %24 {strides = array<i32>} : memref<8x1xf32, #tpu.memory_space<vmem>>, vector<8x1xf32>,
    %c2_i32 = arith.constant 2 : i32
    %26 = arith.cmpi slt, %arg1, %c2_i32 : i32
    %27 = arith.extui %26 : i1 to i32
    %c0_i32_15 = arith.constant 0 : i32
    %28 = arith.cmpi ne, %27, %c0_i32_15 : i32
    scf.if %28 {
      %c0_18 = arith.constant 0 : index
      %c0_19 = arith.constant 0 : index
      %c0_20 = arith.constant 0 : index
      %32 = vector.load %arg4[%c0_18, %c0_19, %c0_20] : memref<1x8x128xf32, #tpu.memory_space<vmem>>, vector<1x8x128xf32>
      %33 = vector.shape_cast %32 : vector<1x8x128xf32> to vector<8x128xf32>
      %c0_21 = arith.constant 0 : index
      %c0_22 = arith.constant 0 : index
      %34 = vector.load %arg5[%c0_21, %c0_22] : memref<1x128xf32, #tpu.memory_space<vmem>>, vector<1x128xf32>
      %35 = vector.broadcast %34 : vector<1x128xf32> to vector<8x128xf32>
      %36 = arith.subf %33, %35 : vector<8x128xf32>
      %37 = vector.broadcast %4 : f32 to vector<8x128xf32>
      %38 = arith.mulf %36, %37 : vector<8x128xf32>
      %cst_23 = arith.constant dense<0xFF800000> : vector<8xf32>
      %39 = vector.multi_reduction <maximumf>, %38, %cst_23 [1] : vector<8x128xf32> to vector<8xf32>
      %40 = vector.shape_cast %39 : vector<8xf32> to vector<8x1xf32>
      %41 = vector.broadcast %40 : vector<8x1xf32> to vector<8x128xf32>
      %42 = arith.subf %38, %41 : vector<8x128xf32>
      %43 = math.exp %42 : vector<8x128xf32>
      %cst_24 = arith.constant dense<0.000000e+00> : vector<8xf32>
      %44 = vector.multi_reduction <add>, %43, %cst_24 [1] : vector<8x128xf32> to vector<8xf32>
      %45 = vector.shape_cast %44 : vector<8xf32> to vector<8x1xf32>
      %46 = tpu.reciprocal %45 {approx = true} : vector<8x1xf32> -> vector<8x1xf32>
      %47 = vector.broadcast %46 : vector<8x1xf32> to vector<8x128xf32>
      %48 = arith.mulf %43, %47 : vector<8x128xf32>
      %c0_25 = arith.constant 0 : index
      %c0_26 = arith.constant 0 : index
      %49 = vector.load %arg8[%c0_25, %c0_26] : memref<8x128xf32, #tpu.memory_space<vmem>>, vector<8x128xf32>
      %50 = arith.addf %49, %48 : vector<8x128xf32>
      %c0_27 = arith.constant 0 : index
      %c0_28 = arith.constant 0 : index
      %51 = vector.load %arg8[%c0_27, %c0_28] : memref<8x128xf32, #tpu.memory_space<vmem>>, vector<8x128xf32>
      tpu.vector_store %arg8[%c0_27, %c0_28], %50 {strides = array<i32>} : memref<8x128xf32, #tpu.memory_space<vmem>>, vector<8x128xf32>,
      %c0_29 = arith.constant 0 : index
      %c0_30 = arith.constant 0 : index
      %c0_31 = arith.constant 0 : index
      %52 = vector.load %arg7[%c0_29, %c0_30, %c0_31] : memref<1x8x128xf32, #tpu.memory_space<vmem>>, vector<1x8x128xf32>
      %cst_32 = arith.constant 1.000000e+00 : f32
      %53 = vector.broadcast %cst_32 : f32 to vector<8x8xf32>
      %cst_33 = arith.constant dense<0.000000e+00> : vector<8x128xf32>
      %54 = tpu.matmul %53, %33, %cst_33 {dimension_numbers = #tpu.dot_dimension_numbers<[1], [0], [0], [1], [0, 0, 1, 1], [], []>} : vector<8x8xf32>, vector<8x128xf32>, vector<8x128xf32> -> vector<8x128xf32>
      %55 = vector.shape_cast %54 : vector<8x128xf32> to vector<1x8x128xf32>
      %56 = arith.addf %52, %55 : vector<1x8x128xf32>
      %c0_34 = arith.constant 0 : index
      %c0_35 = arith.constant 0 : index
      %c0_36 = arith.constant 0 : index
      %57 = vector.load %arg7[%c0_34, %c0_35, %c0_36] : memref<1x8x128xf32, #tpu.memory_space<vmem>>, vector<1x8x128xf32>
      tpu.vector_store %arg7[%c0_34, %c0_35, %c0_36], %56 {strides = array<i32>} : memref<1x8x128xf32, #tpu.memory_space<vmem>>, vector<1x8x128xf32>,
      %c0_37 = arith.constant 0 : index
      %c0_38 = arith.constant 0 : index
      %58 = vector.load %arg10[%c0_37, %c0_38] : memref<8x1xf32, #tpu.memory_space<vmem>>, vector<8x1xf32>
      %59 = arith.mulf %48, %10 : vector<8x128xf32>
      %cst_39 = arith.constant dense<0.000000e+00> : vector<8xf32>
      %60 = vector.multi_reduction <add>, %59, %cst_39 [1] : vector<8x128xf32> to vector<8xf32>
      %61 = vector.shape_cast %60 : vector<8xf32> to vector<8x1xf32>
      %62 = arith.subf %61, %19 : vector<8x1xf32>
      %63 = arith.addf %58, %62 : vector<8x1xf32>
      %c0_40 = arith.constant 0 : index
      %c0_41 = arith.constant 0 : index
      %64 = vector.load %arg10[%c0_40, %c0_41] : memref<8x1xf32, #tpu.memory_space<vmem>>, vector<8x1xf32>
      tpu.vector_store %arg10[%c0_40, %c0_41], %63 {strides = array<i32>} : memref<8x1xf32, #tpu.memory_space<vmem>>, vector<8x1xf32>,
    } else {
    }
    %c2_i32_16 = arith.constant 2 : i32
    %29 = arith.cmpi eq, %arg1, %c2_i32_16 : i32
    %30 = arith.extui %29 : i1 to i32
    %c0_i32_17 = arith.constant 0 : i32
    %31 = arith.cmpi ne, %30, %c0_i32_17 : i32
    scf.if %31 {
      %c0_18 = arith.constant 0 : index
      %c0_19 = arith.constant 0 : index
      %32 = vector.load %arg8[%c0_18, %c0_19] : memref<8x128xf32, #tpu.memory_space<vmem>>, vector<8x128xf32>
      %c0_20 = arith.constant 0 : index
      %c0_21 = arith.constant 0 : index
      %33 = vector.load %arg9[%c0_20, %c0_21] : memref<8x128xf32, #tpu.memory_space<vmem>>, vector<8x128xf32>
      %34 = arith.mulf %32, %33 : vector<8x128xf32>
      %cst_22 = arith.constant dense<0.000000e+00> : vector<8xf32>
      %35 = vector.multi_reduction <add>, %34, %cst_22 [1] : vector<8x128xf32> to vector<8xf32>
      %36 = vector.shape_cast %35 : vector<8xf32> to vector<8x1xf32>
      %c0_23 = arith.constant 0 : index
      %c0_24 = arith.constant 0 : index
      %37 = vector.load %arg11[%c0_23, %c0_24] : memref<8x1xf32, #tpu.memory_space<vmem>>, vector<8x1xf32>
      %cst_25 = arith.constant 2.000000e+00 : f32
      %38 = vector.broadcast %cst_25 : f32 to vector<8x1xf32>
      %39 = arith.mulf %38, %37 : vector<8x1xf32>
      %40 = arith.subf %36, %39 : vector<8x1xf32>
      %c0_26 = arith.constant 0 : index
      %c0_27 = arith.constant 0 : index
      %41 = vector.load %arg10[%c0_26, %c0_27] : memref<8x1xf32, #tpu.memory_space<vmem>>, vector<8x1xf32>
      %42 = arith.subf %40, %41 : vector<8x1xf32>
      %43 = vector.shape_cast %42 : vector<8x1xf32> to vector<1x8x1xf32>
      %cst_28 = arith.constant dense<0.000000e+00> : vector<1xf32>
      %44 = vector.multi_reduction <add>, %43, %cst_28 [1, 2] : vector<1x8x1xf32> to vector<1xf32>
      %45 = vector.shape_cast %44 : vector<1xf32> to vector<1x1x1xf32>
      %46 = vector.extract %45[0, 0, 0] : f32 from vector<1x1x1xf32>
      %cst_29 = arith.constant 0.000000e+00 : f32
      %47 = arith.subf %cst_29, %46 : f32
      %48 = vector.broadcast %47 : f32 to vector<1x8x128xf32>
      %c0_30 = arith.constant 0 : index
      %c0_31 = arith.constant 0 : index
      %c0_32 = arith.constant 0 : index
      %49 = vector.load %arg6[%c0_30, %c0_31, %c0_32] : memref<1x8x128xf32, #tpu.memory_space<vmem>>, vector<1x8x128xf32>
      tpu.vector_store %arg6[%c0_30, %c0_31, %c0_32], %48 {strides = array<i32>} : memref<1x8x128xf32, #tpu.memory_space<vmem>>, vector<1x8x128xf32>,
    } else {
    }
    return
  }
  func.func @transform_0(%arg0: i32, %arg1: i32) -> i32 {
    %c0_i32 = arith.constant 0 : i32
    %c0_i32_0 = arith.constant 0 : i32
    return %c0_i32 : i32
  }
  func.func @transform_1(%arg0: i32, %arg1: i32) -> (i32, i32, i32) {
    %c0_i32 = arith.constant 0 : i32
    %c0_i32_0 = arith.constant 0 : i32
    return %arg1, %arg0, %c0_i32 : i32, i32, i32
  }
  func.func @transform_2(%arg0: i32, %arg1: i32) -> (i32, i32, i32) {
    %c1_i32 = arith.constant 1 : i32
    %0 = arith.minsi %arg1, %c1_i32 : i32
    %c0_i32 = arith.constant 0 : i32
    %c0_i32_0 = arith.constant 0 : i32
    return %0, %arg0, %c0_i32 : i32, i32, i32
  }
  func.func @transform_3(%arg0: i32, %arg1: i32) -> (i32, i32) {
    %c0_i32 = arith.constant 0 : i32
    %c0_i32_0 = arith.constant 0 : i32
    %c0_i32_1 = arith.constant 0 : i32
    return %c0_i32, %c0_i32_0 : i32, i32
  }
  func.func @transform_4(%arg0: i32, %arg1: i32) -> (i32, i32, i32) {
    %c0_i32 = arith.constant 0 : i32
    %c0_i32_0 = arith.constant 0 : i32
    %c0_i32_1 = arith.constant 0 : i32
    return %arg0, %c0_i32, %c0_i32_0 : i32, i32, i32
  }
  func.func @transform_5(%arg0: i32, %arg1: i32) -> (i32, i32, i32) {
    %c0_i32 = arith.constant 0 : i32
    %c0_i32_0 = arith.constant 0 : i32
    %c0_i32_1 = arith.constant 0 : i32
    return %arg0, %c0_i32, %c0_i32_0 : i32, i32, i32
  }
}

</mosaic_0001>

<llo_original>
// kernel: tpu_custom_call.1
$region0: #{tpu_custom_call.1}
  #allocation0 [shape = 'u32[]', space=smem, size = 0x4, offset = 0x4, fixed_abs, tag = 'smem constant byte address 0x4 - core index']
  #allocation1 [shape = 'u32[144,128]{1,0:T(1,128)}', space=vmem, size = 0x12000, scoped, tag = 'internal scratch']
  #allocation2 [shape = 'f32[8,128]{1,0:T(8,128)}', space=vmem, size = 0x1000, scoped, tag = 'scratch operand']
  #allocation3 [shape = 'f32[8,128]{1,0:T(8,128)}', space=vmem, size = 0x1000, scoped, tag = 'scratch operand']
  #allocation4 [shape = 'f32[8,1]{1,0:T(8,128)}', space=vmem, size = 0x1000, scoped, tag = 'scratch operand']
  #allocation5 [shape = 'f32[8,1]{1,0:T(8,128)}', space=vmem, size = 0x1000, scoped, tag = 'scratch operand']
  %s0 = inlined_call_operand.hbm [shape: f32[2], index: 0, kind: input, shape index: {}]
  %s1 = inlined_call_operand.hbm [shape: f32[3,8,128], index: 1, kind: input, shape index: {}]
  %s2 = inlined_call_operand.hbm [shape: f32[2,8,128], index: 2, kind: input, shape index: {}]
  %s3 = inlined_call_operand.vmem [shape: f32[1,128], index: 3, kind: input, shape index: {}]
  %s4 = inlined_call_operand.hbm [shape: f32[1,8,128], index: 4, kind: output, shape index: {0}]
  %s5 = inlined_call_operand.hbm [shape: f32[1,8,128], index: 5, kind: output, shape index: {1}]
  %6 = xla_tuple %s4, %s5
  %s7 = sld [smem:[#allocation0]]
  $region81: #{tpu_custom_call.1} parent=0
    _
  %s9 = ssub.s32 1, %s7
  %s10 = scalar_select 0, %s9, %s7
  $region1: #{tpu_custom_call.1} parent=0
    #allocation6 [shape = 'u8[512]{0}', space=smem, size = 0x200, scoped, tag = 'input window, operand 0, single buffered']
    #allocation7 [shape = 's32[2]{0}', space=sflag, size = 0x8, scoped, tag = 'scoped memory for tpu_custom_call.1']
    #allocation8 [shape = 's32[2]{0}', space=sflag, size = 0x8, scoped, tag = 'scoped memory for tpu_custom_call.1']
    #allocation9 [shape = 's32[2]{0}', space=sflag, size = 0x8, scoped, tag = 'scoped memory for tpu_custom_call.1']
    #allocation10 [shape = 'u8[8192]{0}', space=vmem, size = 0x2000, scoped, tag = 'input window, operand 1']
    #allocation11 [shape = 'u8[8192]{0}', space=vmem, size = 0x2000, scoped, tag = 'input window, operand 2']
    #allocation12 [shape = 's32[2]{0}', space=sflag, size = 0x8, scoped, tag = 'scoped memory for tpu_custom_call.1']
    #allocation13 [shape = 'u8[4096]{0}', space=vmem, size = 0x1000, scoped, tag = 'output window, operand 0, single buffered']
    #allocation14 [shape = 'u8[4096]{0}', space=vmem, size = 0x1000, scoped, tag = 'output window, operand 1, single buffered']
    #allocation15 [shape = 's32[1]{0}', space=sflag, size = 0x4, scoped, tag = 'scoped memory for tpu_custom_call.1']
    %11 = vsyncpa [#allocation9], 0
    %12 = vsyncpa [#allocation7], 0
    %s13 = scalar_lea.sflag [#allocation7], 1
    %14 = vsyncpa %s13, 0
    %15 = vsyncpa [#allocation12], 0
    %s16 = scalar_lea.sflag [#allocation12], 1
    %17 = vsyncpa %s16, 0
    %18 = vsyncpa [#allocation8], 0
    %19 = vsyncpa [#allocation15], 0
    loop: start=0, step=1, limit=5
    $region2: #{tpu_custom_call.1} parent=1 // loop_pre_header
      _
    $region3: #{tpu_custom_call.1} parent=1 // loop_header
      %s21 = sphi 0, %s25
      %p22 = scmp.ge.s32.totalorder %s21, 5
      %s28 = sphi 0, %s40
      %s29 = sphi 0, %s36
      %s30 = sphi 0, %s28
      %s31 = sphi 0, %s29
      %s32 = sphi 0, %s30
      %s33 = sphi 0, %s31
      %s41 = sphi 0, %s41
      %s43 = sphi 0, %s41
      %s44 = sphi 0, %s43
      %s58 = sphi 0, %s44
      %s66 = sphi 0, %s68
      %s69 = sphi 0, %s66
      %s70 = sphi 0, %s69
      %s86 = sphi 0, %s70
      %s98 = sphi 0, %s100
      %s101 = sphi 0, %s98
      %s102 = sphi 0, %s101
      %s118 = sphi 0, %s102
      %s122 = sphi 0, %s122
      %s124 = sphi 0, %s122
      %s125 = sphi 0, %s124
      %s139 = sphi 0, %s125
      %s145 = sphi 0, %s147
      %s148 = sphi 0, %s145
      %s149 = sphi 0, %s148
      %s165 = sphi 0, %s149
      %s171 = sphi 0, %s173
      %s174 = sphi 0, %s171
      %s175 = sphi 0, %s174
      %s191 = sphi 0, %s175
    $region4: #{tpu_custom_call.1} parent=1 // loop_header_branch
      %24 = sbr.rel (%p22) target = $region8
    $region5: #{tpu_custom_call.1} parent=1 // loop_body
      %s26 = ssub.s32 %s21, 1
      %s27 = ssub.s32 %s21, 2
      %s34 = sadd.s32 1, %s29
      %p35 = scmp.ge.s32.totalorder %s34, 3
      %s36 = scalar_select %p35, 0, %s34
      %s37 = sadd.s32 1, %s28
      %s38 = scalar_select %p35, %s37, %s28
      %p39 = scmp.ge.s32.totalorder %s38, 1
      %s40 = scalar_select %p39, 0, %s38
      %s42 = sadd.s32 %s41, 1
      %p45 = scmp.eq.s32.totalorder %s21, 2
      %p46 = scmp.ne.s32.totalorder %s41, %s43
      %p47 = scmp.eq.s32.totalorder %s21, 0
      %p48 = por %p46, %p47
      %p49 = scmp.ne.s32.totalorder %s41, %s43
      %p50 = scmp.eq.s32.totalorder %s26, 2
      %p51 = por %p49, %p50
      %p52 = scmp.ne.s32.totalorder %s43, %s44
      %p53 = scmp.eq.s32.totalorder %s26, 0
      %p54 = por %p52, %p53
      %p55 = scmp.ne.s32.totalorder %s43, %s44
      %p56 = scmp.eq.s32.totalorder %s27, 2
      %p57 = por %p55, %p56
      %p59 = scmp.ne.s32.totalorder %s44, %s58
      %p60 = scmp.eq.s32.totalorder %s27, 0
      %p61 = por %p59, %p60
      %s62 = ssub.s32 %s29, %s36
      %s63 = ssub.s32 %s28, %s40
      %s64 = sor.u32 %s62, %s63
      %p65 = scmp.eq.s32.totalorder %s64, 0
      %s67 = sadd.s32 %s66, 1
      %s68 = scalar_select %p65, %s66, %s67
      %p71 = pneg %p65
      %p72 = scmp.eq.s32.totalorder %s21, 2
      %p73 = por %p71, %p72
      %p74 = scmp.ne.s32.totalorder %s66, %s69
      %p75 = scmp.eq.s32.totalorder %s21, 0
      %p76 = por %p74, %p75
      %p77 = scmp.ne.s32.totalorder %s66, %s69
      %p78 = scmp.eq.s32.totalorder %s26, 2
      %p79 = por %p77, %p78
      %p80 = scmp.ne.s32.totalorder %s69, %s70
      %p81 = scmp.eq.s32.totalorder %s26, 0
      %p82 = por %p80, %p81
      %p83 = scmp.ne.s32.totalorder %s69, %s70
      %p84 = scmp.eq.s32.totalorder %s27, 2
      %p85 = por %p83, %p84
      %p87 = scmp.ne.s32.totalorder %s70, %s86
      %p88 = scmp.eq.s32.totalorder %s27, 0
      %p89 = por %p87, %p88
      %p90 = scmp.lt.s32.totalorder %s29, 1
      %s91 = scalar_select %p90, %s29, 1
      %p92 = scmp.lt.s32.totalorder %s36, 1
      %s93 = scalar_select %p92, %s36, 1
      %s94 = ssub.s32 %s91, %s93
      %s95 = ssub.s32 %s28, %s40
      %s96 = sor.u32 %s94, %s95
      %p97 = scmp.eq.s32.totalorder %s96, 0
      %s99 = sadd.s32 %s98, 1
      %s100 = scalar_select %p97, %s98, %s99
      %p103 = pneg %p97
      %p104 = scmp.eq.s32.totalorder %s21, 2
      %p105 = por %p103, %p104
      %p106 = scmp.ne.s32.totalorder %s98, %s101
      %p107 = scmp.eq.s32.totalorder %s21, 0
      %p108 = por %p106, %p107
      %p109 = scmp.ne.s32.totalorder %s98, %s101
      %p110 = scmp.eq.s32.totalorder %s26, 2
      %p111 = por %p109, %p110
      %p112 = scmp.ne.s32.totalorder %s101, %s102
      %p113 = scmp.eq.s32.totalorder %s26, 0
      %p114 = por %p112, %p113
      %p115 = scmp.ne.s32.totalorder %s101, %s102
      %p116 = scmp.eq.s32.totalorder %s27, 2
      %p117 = por %p115, %p116
      %p119 = scmp.ne.s32.totalorder %s102, %s118
      %p120 = scmp.eq.s32.totalorder %s27, 0
      %p121 = por %p119, %p120
      %s123 = sadd.s32 %s122, 1
      %p126 = scmp.eq.s32.totalorder %s21, 2
      %p127 = scmp.ne.s32.totalorder %s122, %s124
      %p128 = scmp.eq.s32.totalorder %s21, 0
      %p129 = por %p127, %p128
      %p130 = scmp.ne.s32.totalorder %s122, %s124
      %p131 = scmp.eq.s32.totalorder %s26, 2
      %p132 = por %p130, %p131
      %p133 = scmp.ne.s32.totalorder %s124, %s125
      %p134 = scmp.eq.s32.totalorder %s26, 0
      %p135 = por %p133, %p134
      %p136 = scmp.ne.s32.totalorder %s124, %s125
      %p137 = scmp.eq.s32.totalorder %s27, 2
      %p138 = por %p136, %p137
      %p140 = scmp.ne.s32.totalorder %s125, %s139
      %p141 = scmp.eq.s32.totalorder %s27, 0
      %p142 = por %p140, %p141
      %s143 = ssub.s32 %s28, %s40
      %p144 = scmp.eq.s32.totalorder %s143, 0
      %s146 = sadd.s32 %s145, 1
      %s147 = scalar_select %p144, %s145, %s146
      %p150 = pneg %p144
      %p151 = scmp.eq.s32.totalorder %s21, 2
      %p152 = por %p150, %p151
      %p153 = scmp.ne.s32.totalorder %s145, %s148
      %p154 = scmp.eq.s32.totalorder %s21, 0
      %p155 = por %p153, %p154
      %p156 = scmp.ne.s32.totalorder %s145, %s148
      %p157 = scmp.eq.s32.totalorder %s26, 2
      %p158 = por %p156, %p157
      %p159 = scmp.ne.s32.totalorder %s148, %s149
      %p160 = scmp.eq.s32.totalorder %s26, 0
      %p161 = por %p159, %p160
      %p162 = scmp.ne.s32.totalorder %s148, %s149
      %p163 = scmp.eq.s32.totalorder %s27, 2
      %p164 = por %p162, %p163
      %p166 = scmp.ne.s32.totalorder %s149, %s165
      %p167 = scmp.eq.s32.totalorder %s27, 0
      %p168 = por %p166, %p167
      %s169 = ssub.s32 %s28, %s40
      %p170 = scmp.eq.s32.totalorder %s169, 0
      %s172 = sadd.s32 %s171, 1
      %s173 = scalar_select %p170, %s171, %s172
      %p176 = pneg %p170
      %p177 = scmp.eq.s32.totalorder %s21, 2
      %p178 = por %p176, %p177
      %p179 = scmp.ne.s32.totalorder %s171, %s174
      %p180 = scmp.eq.s32.totalorder %s21, 0
      %p181 = por %p179, %p180
      %p182 = scmp.ne.s32.totalorder %s171, %s174
      %p183 = scmp.eq.s32.totalorder %s26, 2
      %p184 = por %p182, %p183
      %p185 = scmp.ne.s32.totalorder %s174, %s175
      %p186 = scmp.eq.s32.totalorder %s26, 0
      %p187 = por %p185, %p186
      %p188 = scmp.ne.s32.totalorder %s174, %s175
      %p189 = scmp.eq.s32.totalorder %s27, 2
      %p190 = por %p188, %p189
      %p192 = scmp.ne.s32.totalorder %s175, %s191
      %p193 = scmp.eq.s32.totalorder %s27, 0
      %p194 = por %p192, %p193
      %p195 = scmp.le.s32.totalorder 1, %s21
      %p196 = scmp.lt.s32.totalorder %s21, 4
      %p197 = pnand %p195, %p196
      %p198 = pneg %p197
      // Predicated region
      $region9: #{tpu_custom_call.1} parent=5 // pred_check
        _
      $region10: #{tpu_custom_call.1} parent=5 // pred_check_branch
        %200 = sbr.rel (%p197) target = $region12
      $region11: #{tpu_custom_call.1} parent=5 // pred_region
        %s201 = ssub.s32 %s21, 1
        // Predicated region
        $region13: #{tpu_custom_call.1} parent=11 // pred_check
          %p202 = pneg %p54
        $region14: #{tpu_custom_call.1} parent=11 // pred_check_branch
          %204 = sbr.rel (%p202) target = $region16
        $region15: #{tpu_custom_call.1} parent=11 // pred_region
          %s206 = ssub.s32 16, 16
          %207 = vsyncadd [#allocation9], %s206
          %210 = dma.hbm_to_smem %s0, 16, [#allocation6], [#allocation9]
        $region16: #{tpu_custom_call.1} parent=11 // pred_fallthru
          _
        // Predicated region
        $region17: #{tpu_custom_call.1} parent=11 // pred_check
          %p211 = pneg %p135
        $region18: #{tpu_custom_call.1} parent=11 // pred_check_branch
          %213 = sbr.rel (%p211) target = $region20
        $region19: #{tpu_custom_call.1} parent=11 // pred_region
          _
        $region20: #{tpu_custom_call.1} parent=11 // pred_fallthru
          _
      $region12: #{tpu_custom_call.1} parent=5 // pred_fallthru
        _
      %p214 = scmp.lt.s32.totalorder %s21, 3
      // Predicated region
      $region21: #{tpu_custom_call.1} parent=5 // pred_check
        %p215 = pneg %p214
      $region22: #{tpu_custom_call.1} parent=5 // pred_check_branch
        %217 = sbr.rel (%p215) target = $region24
      $region23: #{tpu_custom_call.1} parent=5 // pred_region
        // Predicated region
        $region25: #{tpu_custom_call.1} parent=23 // pred_check
          %p218 = pneg %p76
        $region26: #{tpu_custom_call.1} parent=23 // pred_check_branch
          %220 = sbr.rel (%p218) target = $region28
        $region27: #{tpu_custom_call.1} parent=23 // pred_region
          %s221 = sand.u32 %s66, 1
          %s222 = scalar_lea.sflag [#allocation7], %s221
          %s223 = sand.u32 %s66, 1
          %s224 = smul.addr %s223, 8
          %s225 = scalar_lea.vmem [#allocation10], %s224
          %s227 = ssub.s32 128, 128
          %228 = vsyncadd %s222, %s227
          %s229 = sadd.s32 %s28, %s29
          %s230 = smul.addr %s229, 128
          %s231 = scalar_lea.hbm %s1, %s230
          %s233 = sshll.u32 %s225, 4
          %s234 = int_to_ptr.vmem [resolvable:$true] %s233
          %236 = dma.hbm_to_vmem [thread:$0]  %s231, 128, %s234, %s222
        $region28: #{tpu_custom_call.1} parent=23 // pred_fallthru
          _
        // Predicated region
        $region29: #{tpu_custom_call.1} parent=23 // pred_check
          %p237 = pneg %p108
        $region30: #{tpu_custom_call.1} parent=23 // pred_check_branch
          %239 = sbr.rel (%p237) target = $region32
        $region31: #{tpu_custom_call.1} parent=23 // pred_region
          %s240 = sand.u32 %s98, 1
          %s241 = scalar_lea.sflag [#allocation12], %s240
          %s242 = sand.u32 %s98, 1
          %s243 = smul.addr %s242, 8
          %s244 = scalar_lea.vmem [#allocation11], %s243
          %p245 = scmp.lt.s32.totalorder %s29, 1
          %s246 = scalar_select %p245, %s29, 1
          %s248 = ssub.s32 128, 128
          %249 = vsyncadd %s241, %s248
          %s250 = sadd.s32 %s28, %s246
          %s251 = smul.addr %s250, 128
          %s252 = scalar_lea.hbm %s2, %s251
          %s254 = sshll.u32 %s244, 4
          %s255 = int_to_ptr.vmem [resolvable:$true] %s254
          %257 = dma.hbm_to_vmem [thread:$0]  %s252, 128, %s255, %s241
        $region32: #{tpu_custom_call.1} parent=23 // pred_fallthru
          _
      $region24: #{tpu_custom_call.1} parent=5 // pred_fallthru
        _
      %p258 = scmp.le.s32.totalorder 1, %s21
      %p259 = scmp.lt.s32.totalorder %s21, 4
      %p260 = pnand %p258, %p259
      %p261 = pneg %p260
      // Predicated region
      $region33: #{tpu_custom_call.1} parent=5 // pred_check
        _
      $region34: #{tpu_custom_call.1} parent=5 // pred_check_branch
        %263 = sbr.rel (%p260) target = $region36
      $region35: #{tpu_custom_call.1} parent=5 // pred_region
        %s264 = ssub.s32 %s21, 1
        // Predicated region
        $region37: #{tpu_custom_call.1} parent=35 // pred_check
          %p265 = pneg %p54
        $region38: #{tpu_custom_call.1} parent=35 // pred_check_branch
          %267 = sbr.rel (%p265) target = $region40
        $region39: #{tpu_custom_call.1} parent=35 // pred_region
          %268 = dma.done [#allocation9], 16
        $region40: #{tpu_custom_call.1} parent=35 // pred_fallthru
          _
        %s269 = sand.u32 %s69, 1
        %s270 = scalar_lea.sflag [#allocation7], %s269
        %s271 = sand.u32 %s69, 1
        %s272 = smul.addr %s271, 8
        %s273 = scalar_lea.vmem [#allocation10], %s272
        // Predicated region
        $region41: #{tpu_custom_call.1} parent=35 // pred_check
          %p274 = pneg %p82
        $region42: #{tpu_custom_call.1} parent=35 // pred_check_branch
          %276 = sbr.rel (%p274) target = $region44
        $region43: #{tpu_custom_call.1} parent=35 // pred_region
          %277 = dma.done %s270, 128
        $region44: #{tpu_custom_call.1} parent=35 // pred_fallthru
          _
        %s278 = sand.u32 %s101, 1
        %s279 = scalar_lea.sflag [#allocation12], %s278
        %s280 = sand.u32 %s101, 1
        %s281 = smul.addr %s280, 8
        %s282 = scalar_lea.vmem [#allocation11], %s281
        // Predicated region
        $region45: #{tpu_custom_call.1} parent=35 // pred_check
          %p283 = pneg %p114
        $region46: #{tpu_custom_call.1} parent=35 // pred_check_branch
          %285 = sbr.rel (%p283) target = $region48
        $region47: #{tpu_custom_call.1} parent=35 // pred_region
          %286 = dma.done %s279, 128
        $region48: #{tpu_custom_call.1} parent=35 // pred_fallthru
          _
        %287 = sfence
        %p288 = pneg %p54
        %p289 = pneg %p51
        %s290 = sand.u32 %s69, 1
        %s291 = scalar_lea.sflag [#allocation7], %s290
        %s292 = sand.u32 %s69, 1
        %s293 = smul.addr %s292, 8
        %s294 = scalar_lea.vmem [#allocation10], %s293
        %p295 = pneg %p82
        %p296 = pneg %p79
        %s297 = sand.u32 %s101, 1
        %s298 = scalar_lea.sflag [#allocation12], %s297
        %s299 = sand.u32 %s101, 1
        %s300 = smul.addr %s299, 8
        %s301 = scalar_lea.vmem [#allocation11], %s300
        %p302 = pneg %p114
        %p303 = pneg %p111
        %p304 = pneg %p135
        %p305 = pneg %p132
        %p306 = pneg %p161
        %p307 = pneg %p158
        %p308 = pneg %p187
        %p309 = pneg %p184
        %p310 = scmp.lt.s32.totalorder %s31, 1
        %s311 = scalar_select %p310, %s31, 1
        %p312 = scmp.eq.s32.totalorder %s31, 0
        // Predicated region
        $region49: #{tpu_custom_call.1} parent=35 // pred_check
          %p313 = pneg %p312
        $region50: #{tpu_custom_call.1} parent=35 // pred_check_branch
          %315 = sbr.rel (%p313) target = $region52
        $region51: #{tpu_custom_call.1} parent=35 // pred_region
          %316 = vst [vmem:[#allocation2] sm:$0xff] 0.0
          %317 = vst [vmem:[#allocation3] sm:$0xff] 0.0
          %vm318 = vcmask 7168
          %319 = vst.msk [vmem:[#allocation4] sm:$0xff] %vm318, 0.0
          %320 = vst.msk [vmem:[#allocation5] sm:$0xff] %vm318, 0.0
          %321 = vst [vmem:[#allocation14] sm:$0xff] 0.0
          %322 = vst [vmem:[#allocation13] sm:$0xff] 0.0
        $region52: #{tpu_custom_call.1} parent=35 // pred_fallthru
          _
        %s323 = sld [smem:[#allocation6]]
        %v324 = vstv %s323
        %v325 = vrcp.pop %v324
        %s326 = vtos %v325
        %s327 = sld [smem:[#allocation6 + $0x1]]
        %v328 = vstv %s327
        %v329 = vrcp.pop %v328
        %s330 = vtos %v329
        %v331 = vld [vmem:[%s273] sm:$0xff]
        %v332 = vstv %s330
        %v333 = vmul.f32 %v331, %v332
        %334 = vmax.xlane.f32.xlu0 %v333
        %v335 = vpop.xlane.xlu0 %334
        %v336 = vsub.f32 %v333, %v335
        %v337 = vmul.f32 %v336, 1.442695
        %v338 = vpow.pop %v337
        %339 = vadd.xlane.f32.xlu0 %v338
        %v340 = vpop.xlane.xlu0 %339
        %v341 = vlog2.pop %v340
        %v342 = vmul.f32 %v341, 0.6931472
        %v343 = vadd.f32 %v335, %v342
        %v344 = vld [vmem:[#allocation3] sm:$0xff]
        %v345 = vadd.f32 %v344, %v333
        %346 = vst [vmem:[#allocation3] sm:$0xff] %v345
        %v347 = vld [vmem:[#allocation5] sm:$0xff]
        %v348 = vadd.f32 %v347, %v343
        %vm349 = vcmask 7168
        %350 = vst.msk [vmem:[#allocation5] sm:$0xff] %vm349, %v348
        %p351 = scmp.lt.s32.totalorder %s31, 2
        // Predicated region
        $region53: #{tpu_custom_call.1} parent=35 // pred_check
          %p352 = pneg %p351
        $region54: #{tpu_custom_call.1} parent=35 // pred_check_branch
          %354 = sbr.rel (%p352) target = $region56
        $region55: #{tpu_custom_call.1} parent=35 // pred_region
          %v355 = vld [vmem:[%s282] sm:$0xff]
          %v356 = vld [vmem:[%s3] sm:$0x1]
          %v358 = vlaneseq
          %v359 = vshrl.u32 %v358, 7
          %v360 = vsub.s32 0, %v359
          %v361 = vrot.slane %v356, %v360
          %v363 = vsub.f32 %v355, %v361
          %v364 = vstv %s326
          %v365 = vmul.f32 %v363, %v364
          %366 = vmax.xlane.f32.xlu0 %v365
          %v367 = vpop.xlane.xlu0 %366
          %v368 = vsub.f32 %v365, %v367
          %v369 = vmul.f32 %v368, 1.442695
          %v370 = vpow.pop %v369
          %371 = vadd.xlane.f32.xlu0 %v370
          %v372 = vpop.xlane.xlu0 %371
          %v373 = vrcp.pop %v372
          %v374 = vmul.f32 %v370, %v373
          %v375 = vld [vmem:[#allocation2] sm:$0xff]
          %v376 = vadd.f32 %v375, %v374
          %377 = vst [vmem:[#allocation2] sm:$0xff] %v376
          %v378 = vld [vmem:[#allocation14] sm:$0xff]
          %vm379 = vcmask 64512
          %v381 = vsel %vm379, 1.0, 0
          %383 = vmatprep.subr.mxu0 0.0
          %384 = vmatpush1.msra.mxu0 %v355
          %385 = vmatprep.subr.mxu0 0.0
          %386 = vmatpush1.msra.mxu0 0.0
          %387 = vmatprep.subr.mxu0 0.0
          %388 = vmatpush1.msra.mxu0 0.0
          %389 = vmatprep.subr.mxu0 0.0
          %390 = vmatpush1.msra.mxu0 0.0
          %391 = vmatprep.subr.mxu0 0.0
          %392 = vmatpush1.msra.mxu0 0.0
          %393 = vmatprep.subr.mxu0 0.0
          %394 = vmatpush1.msra.mxu0 0.0
          %395 = vmatprep.subr.mxu0 0.0
          %396 = vmatpush1.msra.mxu0 0.0
          %397 = vmatprep.subr.mxu0 0.0
          %398 = vmatpush1.msra.mxu0 0.0
          %399 = vmatprep.subr.mxu0 0.0
          %400 = vmatpush1.msra.mxu0 0.0
          %401 = vmatprep.subr.mxu0 0.0
          %402 = vmatpush1.msra.mxu0 0.0
          %403 = vmatprep.subr.mxu0 0.0
          %404 = vmatpush1.msra.mxu0 0.0
          %405 = vmatprep.subr.mxu0 0.0
          %406 = vmatpush1.msra.mxu0 0.0
          %407 = vmatprep.subr.mxu0 0.0
          %408 = vmatpush1.msra.mxu0 0.0
          %409 = vmatprep.subr.mxu0 0.0
          %410 = vmatpush1.msra.mxu0 0.0
          %411 = vmatprep.subr.mxu0 0.0
          %412 = vmatpush1.msra.mxu0 0.0
          %413 = vmatprep.subr.mxu0 0.0
          %414 = vmatpush1.msra.mxu0 0.0
          %415 = vmatprep.subr.mxu0 0.0
          %416 = vmatpush1.msra.mxu0 0.0
          %417 = vmatprep.subr.mxu0 0.0
          %418 = vmatpush1.msra.mxu0 0.0
          %419 = vmatprep.subr.mxu0 0.0
          %420 = vmatpush1.msra.mxu0 0.0
          %421 = vmatprep.subr.mxu0 0.0
          %422 = vmatpush1.msra.mxu0 0.0
          %423 = vmatprep.subr.mxu0 0.0
          %424 = vmatpush1.msra.mxu0 0.0
          %425 = vmatprep.subr.mxu0 0.0
          %426 = vmatpush1.msra.mxu0 0.0
          %427 = vmatprep.subr.mxu0 0.0
          %428 = vmatpush1.msra.mxu0 0.0
          %429 = vmatprep.subr.mxu0 0.0
          %430 = vmatpush1.msra.mxu0 0.0
          %431 = vmatprep.subr.mxu0 0.0
          %432 = vmatpush1.msra.mxu0 0.0
          %433 = vmatprep.subr.mxu0 0.0
          %434 = vmatpush1.msra.mxu0 0.0
          %435 = vmatprep.subr.mxu0 0.0
          %436 = vmatpush1.msra.mxu0 0.0
          %437 = vmatprep.subr.mxu0 0.0
          %438 = vmatpush1.msra.mxu0 0.0
          %439 = vmatprep.subr.mxu0 0.0
          %440 = vmatpush1.msra.mxu0 0.0
          %441 = vmatprep.subr.mxu0 0.0
          %442 = vmatpush1.msra.mxu0 0.0
          %443 = vmatprep.subr.mxu0 0.0
          %444 = vmatpush1.msra.mxu0 0.0
          %445 = vmatprep.subr.mxu0 0.0
          %446 = vmatpush1.msra.mxu0 0.0
          %447 = vmatprep.mubr.f32.mxu0 0.0
          %448 = vmatmul.mubr.f32.gmra.mrb[0].mxu0 %v381
          %v449 = vpop.f32.mrb[0].mxu0
          %v450 = vadd.f32 0.0, %v449
          %v451 = vpop.f32.mrb[0].mxu0
          %452 = vdwg.mxu0
          %v453 = vadd.f32 %v378, %v450
          %454 = vst [vmem:[#allocation14] sm:$0xff] %v453
          %v455 = vld [vmem:[#allocation4] sm:$0xff]
          %v456 = vmul.f32 %v374, %v333
          %457 = vadd.xlane.f32.xlu0 %v456
          %v458 = vpop.xlane.xlu0 %457
          %v459 = vsub.f32 %v458, %v343
          %v460 = vadd.f32 %v455, %v459
          %461 = vst.msk [vmem:[#allocation4] sm:$0xff] %vm349, %v460
        $region56: #{tpu_custom_call.1} parent=35 // pred_fallthru
          _
        %p462 = scmp.eq.s32.totalorder %s31, 2
        // Predicated region
        $region57: #{tpu_custom_call.1} parent=35 // pred_check
          %p463 = pneg %p462
        $region58: #{tpu_custom_call.1} parent=35 // pred_check_branch
          %465 = sbr.rel (%p463) target = $region60
        $region59: #{tpu_custom_call.1} parent=35 // pred_region
          %v466 = vld [vmem:[#allocation2] sm:$0xff]
          %v467 = vld [vmem:[#allocation3] sm:$0xff]
          %v468 = vmul.f32 %v466, %v467
          %469 = vadd.xlane.f32.xlu0 %v468
          %v470 = vpop.xlane.xlu0 %469
          %v471 = vld [vmem:[#allocation5] sm:$0xff]
          %v472 = vmul.f32 %v471, 2.0
          %v473 = vsub.f32 %v470, %v472
          %v474 = vld [vmem:[#allocation4] sm:$0xff]
          %v475 = vsub.f32 %v473, %v474
          %v476 = vsel %vm349, %v475, 0.0
          %477 = vadd.xlane.f32.xlu0 %v476
          %v478 = vpop.xlane.xlu0 %477
          %v479 = vrot.slane %v478, 4
          %v480 = vadd.f32 %v478, %v479
          %v481 = vrot.slane %v480, 2
          %v482 = vadd.f32 %v480, %v481
          %v483 = vrot.slane %v482, 1
          %v484 = vadd.f32 %v482, %v483
          %s485 = vtos %v484
          %s486 = ssub.f32 0.0, %s485
          %v487 = vstv %s486
          %488 = vst [vmem:[#allocation13] sm:$0xff] %v487
        $region60: #{tpu_custom_call.1} parent=35 // pred_fallthru
          _
        // Predicated region
        $region61: #{tpu_custom_call.1} parent=35 // pred_check
          %p489 = pneg %p158
        $region62: #{tpu_custom_call.1} parent=35 // pred_check_branch
          %491 = sbr.rel (%p489) target = $region64
        $region63: #{tpu_custom_call.1} parent=35 // pred_region
          %s493 = ssub.s32 128, 128
          %494 = vsyncadd [#allocation8], %s493
          %s495 = smul.addr %s30, 128
          %s496 = scalar_lea.hbm %s4, %s495
          %s498 = sshll.u32 [#allocation13], 4
          %s499 = int_to_ptr.vmem [resolvable:$true] %s498
          %501 = dma.vmem_to_hbm [thread:$0]  %s499, 128, %s496, [#allocation8]
        $region64: #{tpu_custom_call.1} parent=35 // pred_fallthru
          _
        // Predicated region
        $region65: #{tpu_custom_call.1} parent=35 // pred_check
          %p502 = pneg %p184
        $region66: #{tpu_custom_call.1} parent=35 // pred_check_branch
          %504 = sbr.rel (%p502) target = $region68
        $region67: #{tpu_custom_call.1} parent=35 // pred_region
          %s506 = ssub.s32 128, 128
          %507 = vsyncadd [#allocation15], %s506
          %s508 = smul.addr %s30, 128
          %s509 = scalar_lea.hbm %s5, %s508
          %s511 = sshll.u32 [#allocation14], 4
          %s512 = int_to_ptr.vmem [resolvable:$true] %s511
          %514 = dma.vmem_to_hbm [thread:$0]  %s512, 128, %s509, [#allocation15]
        $region68: #{tpu_custom_call.1} parent=35 // pred_fallthru
          _
        // Predicated region
        $region69: #{tpu_custom_call.1} parent=35 // pred_check
          %p515 = pneg %p158
        $region70: #{tpu_custom_call.1} parent=35 // pred_check_branch
          %517 = sbr.rel (%p515) target = $region72
        $region71: #{tpu_custom_call.1} parent=35 // pred_region
          %518 = dma.done [#allocation8], 128
        $region72: #{tpu_custom_call.1} parent=35 // pred_fallthru
          _
        // Predicated region
        $region73: #{tpu_custom_call.1} parent=35 // pred_check
          %p519 = pneg %p184
        $region74: #{tpu_custom_call.1} parent=35 // pred_check_branch
          %521 = sbr.rel (%p519) target = $region76
        $region75: #{tpu_custom_call.1} parent=35 // pred_region
          %522 = dma.done [#allocation15], 128
        $region76: #{tpu_custom_call.1} parent=35 // pred_fallthru
          _
      $region36: #{tpu_custom_call.1} parent=5 // pred_fallthru
        _
      %p523 = scmp.le.s32.totalorder 2, %s21
      // Predicated region
      $region77: #{tpu_custom_call.1} parent=5 // pred_check
        %p524 = pneg %p523
      $region78: #{tpu_custom_call.1} parent=5 // pred_check_branch
        %526 = sbr.rel (%p524) target = $region80
      $region79: #{tpu_custom_call.1} parent=5 // pred_region
        %s527 = ssub.s32 %s21, 2
      $region80: #{tpu_custom_call.1} parent=5 // pred_fallthru
        _
    $region6: #{tpu_custom_call.1} parent=1 // loop_footer
      %s25 = sadd.s32 1, %s21
    $region7: #{tpu_custom_call.1} parent=1 // loop_footer_branch
      %20 = sbr.rel target = $region3
    $region8: #{tpu_custom_call.1} parent=1 // loop_exit
      _
    %528 = vsyncpa [#allocation7], 1
    %s529 = scalar_lea.sflag [#allocation7], 1
    %530 = vsyncpa %s529, 1
    %531 = vsyncpa [#allocation12], 1
    %s532 = scalar_lea.sflag [#allocation12], 1
    %533 = vsyncpa %s532, 1
    %534 = vsyncpa [#allocation8], 1
    %s535 = scalar_lea.sflag [#allocation8], 1
    %536 = vsyncpa %s535, 1
    %537 = vsyncpa [#allocation15], 1
    %538 = vsyncpa [#allocation9], 1
    %s539 = scalar_lea.sflag [#allocation9], 1
    %540 = vsyncpa %s539, 1

</llo_original>
